<compile_context>
chip_gen: v7x
topology: tpu7x:2x2x1
jax: 0.10.0
libtpu: 0.0.40
codegen_flags: <defaults>
</compile_context>

<pallas_src>
import functools

import numpy as np

import jax
import jax.numpy as jnp
from jax.experimental import pallas as pl
from jax.experimental.pallas import tpu as pltpu

EPS = 1e-5          # PyTorch InstanceNorm2d default eps
NEG_SLOPE = 0.2     # LeakyReLU negative slope


def _banded_conv_weights(w_hwio, W, dtype):
    """Repack 3x3 HWIO weights (3,3,Ci,Co) into one K-concatenated banded slab
    of shape (3*W*Ci, W*Co).

    With activations row-packed as (rows, W*Ci) and one zero halo row above /
    below each image, a 'same' 3x3 conv becomes a single matmul of the
    lane-concatenated row windows [pad[r], pad[r+1], pad[r+2]] against this
    slab.  Out-of-range x taps have no weight entries, so no x padding is
    needed.  One-time host-side transform (precomputed in a real model).
    """
    w = np.asarray(w_hwio, dtype=np.float32)          # (3, 3, Ci, Co)
    _, _, ci, co = w.shape
    B = np.zeros((3, W * ci, W * co), np.float32)
    for dy in range(3):
        for dx in range(3):
            for x in range(W):
                xs = x + dx - 1                       # source column
                if 0 <= xs < W:
                    B[dy, xs * ci:(xs + 1) * ci, x * co:(x + 1) * co] = w[dy, dx]
    return jnp.asarray(B.reshape(3 * W * ci, W * co), dtype=dtype)


def _conv_block_kernel(x_ref, b1_ref, b2_ref, o_ref, pad1_ref, pad2_ref,
                       *, NB, H, W, Cin, Cout, mxu_dtype):
    # x_ref   : (NB, H, W*Cin)          channels-last input, row packed on lanes
    # b1_ref  : (3*W*Cin,  W*Cout)      K-concat banded conv-1 weights (mxu dtype)
    # b2_ref  : (3*W*Cout, W*Cout)      K-concat banded conv-2 weights (mxu dtype)
    # o_ref   : (NB, H, W*Cout)         lane-dense output block
    # pad1/2  : (NB*(H+2), W*C) f32     stacked per-image padded slabs
    WCi = W * Cin
    WCo = W * Cout
    RP = H + 2                  # padded rows per image in the stacked slab
    M = NB * RP - 2             # matmul M: all 3-row window start positions

    def conv3x3(pad_ref, bcat_ref):
        # Fused 3x3 "same" conv: one MXU matmul.  The three dy row-windows of
        # the padded slab are lane-concatenated into an (M, 3*W*Cin) LHS and
        # multiplied by a single K-concatenated banded weight slab.  bf16 (or
        # f32) operands, f32 accumulation.
        lhs = jnp.concatenate(
            [pad_ref[0:M, :], pad_ref[1:M + 1, :], pad_ref[2:M + 2, :]],
            axis=1)
        return jnp.dot(lhs.astype(mxu_dtype), bcat_ref[...],
                       preferred_element_type=jnp.float32)      # (M, WCo) f32

    def inorm_lrelu(z):
        # InstanceNorm2d (biased var, eps=1e-5) + LeakyReLU(0.2) on the packed
        # (M, W*Cout) conv output.  Stats are per image / per channel, so each
        # image's valid H rows are sliced out (seam rows are junk and ignored).
        # Both moments of all NB images are stacked into one (2*NB, W*Cout)
        # array so the log2(W) butterfly lane-rolls (XLU) run once per conv.
        # All statistics and the normalization stay f32.
        slabs = [z[n * RP:n * RP + H, :] for n in range(NB)]
        stats = []
        for y in slabs:
            stats.append(jnp.sum(y, axis=0, keepdims=True))      # (1, WCo)
            stats.append(jnp.sum(y * y, axis=0, keepdims=True))  # (1, WCo)
        st = jnp.concatenate(stats, axis=0)                      # (2*NB, WCo)
        shift = Cout
        while shift < WCo:                                       # W power of 2
            st = st + pltpu.roll(st, shift, 1)
            shift *= 2
        inv_n = 1.0 / (H * W)
        outs = []
        for i, y in enumerate(slabs):
            mean = st[2 * i:2 * i + 1, :] * inv_n
            var = jnp.maximum(st[2 * i + 1:2 * i + 2, :] * inv_n - mean * mean,
                              0.0)
            yn = (y - mean) * jax.lax.rsqrt(var + EPS)
            outs.append(jnp.where(yn >= 0, yn, NEG_SLOPE * yn))
        return outs                                              # NB x (H, WCo)

    def fill_padded(pad_ref, rows, zero_row):
        # Per-image halo padding inside VMEM: only the 2 halo rows per image
        # are zeroed (interior rows are fully overwritten every step).
        for n in range(NB):
            base = n * RP
            pad_ref[base:base + 1, :] = zero_row
            pad_ref[base + 1:base + 1 + H, :] = rows(n)
            pad_ref[base + H + 1:base + H + 2, :] = zero_row

    zci = jnp.zeros((1, WCi), jnp.float32)
    zco = jnp.zeros((1, WCo), jnp.float32)

    # ---- conv #1 -> InstanceNorm -> LeakyReLU (Dropout2d(0.0) == identity) ----
    fill_padded(pad1_ref, lambda n: x_ref[n], zci)
    h1 = inorm_lrelu(conv3x3(pad1_ref, b1_ref))

    # ---- conv #2 -> InstanceNorm -> LeakyReLU ----
    fill_padded(pad2_ref, lambda n: h1[n], zco)
    h2 = inorm_lrelu(conv3x3(pad2_ref, b2_ref))

    for n in range(NB):
        o_ref[n] = h2[n].astype(o_ref.dtype)                    # lane-dense store


def conv_block_pallas_packed(x_packed, b1cat, b2cat, *, in_chans, out_chans,
                             mxu_dtype=jnp.bfloat16, block_n=None):
    """ConvBlock on the packed channels-last layout.

    x_packed : (N, H, W*in_chans) float32, x-row packed on the lane axis.
    b1cat    : (3*W*in_chans,  W*out_chans) K-concat banded conv-1 weights.
    b2cat    : (3*W*out_chans, W*out_chans) K-concat banded conv-2 weights.
    Returns (N, H, W*out_chans) float32 in the same packed layout so a chain of
    ConvBlocks never round-trips through NCHW.
    """
    N, H, WCi = x_packed.shape
    Cin, Cout = in_chans, out_chans
    W = WCi // Cin
    assert W * Cin == WCi
    assert W > 0 and (W & (W - 1)) == 0, "roll-reduction assumes power-of-two W"
    WCo = W * Cout
    assert b1cat.shape == (3 * WCi, WCo) and b2cat.shape == (3 * WCo, WCo)

    NB = N if block_n is None else block_n   # images folded into the MXU M dim
    assert N % NB == 0  # TODO(synk): pad/mask a ragged final batch block
    RP = H + 2

    kernel = functools.partial(_conv_block_kernel, NB=NB, H=H, W=W,
                               Cin=Cin, Cout=Cout, mxu_dtype=mxu_dtype)

    return pl.pallas_call(
        kernel,
        out_shape=jax.ShapeDtypeStruct((N, H, WCo), jnp.float32),
        grid_spec=pltpu.PrefetchScalarGridSpec(
            num_scalar_prefetch=0,
            grid=(N // NB,),
            in_specs=[
                pl.BlockSpec((NB, H, WCi), lambda b: (b, 0, 0)),
                # Constant-index weight slabs (loaded once per grid step).
                pl.BlockSpec((3 * WCi, WCo), lambda b: (0, 0)),
                pl.BlockSpec((3 * WCo, WCo), lambda b: (0, 0)),
            ],
            out_specs=pl.BlockSpec((NB, H, WCo), lambda b: (b, 0, 0)),
            scratch_shapes=[
                pltpu.VMEM((NB * RP, WCi), jnp.float32),   # padded input slab
                pltpu.VMEM((NB * RP, WCo), jnp.float32),   # padded hidden slab
            ],
        ),
        compiler_params=pltpu.CompilerParams(
            dimension_semantics=("parallel",),
            vmem_limit_bytes=16 * 1024 * 1024),
    )(x_packed, b1cat, b2cat)


def conv_block_pallas(x_nchw, w1, w2, *, mxu_dtype=jnp.bfloat16, block_n=None):
    """NCHW boundary wrapper.  In a PromptMR chain, keep activations in the
    packed layout and call conv_block_pallas_packed directly between blocks;
    the layout transposes here are full HBM round trips, done only once at the
    model boundary."""
    N, Cin, H, W = x_nchw.shape
    Cout = w1.shape[-1]
    x_packed = jnp.transpose(x_nchw.astype(jnp.float32), (0, 2, 3, 1)) \
                  .reshape(N, H, W * Cin)
    b1 = _banded_conv_weights(w1, W, mxu_dtype)    # (3*W*Cin,  W*Cout)
    b2 = _banded_conv_weights(w2, W, mxu_dtype)    # (3*W*Cout, W*Cout)
    out_packed = conv_block_pallas_packed(
        x_packed, b1, b2, in_chans=Cin, out_chans=Cout,
        mxu_dtype=mxu_dtype, block_n=block_n)
    return jnp.transpose(out_packed.reshape(N, H, W, Cout), (0, 3, 1, 2))


def conv_block_ref(x_nchw, w1, w2):
    """Pure-JAX reference (XLA convs) for correctness checking."""
    x = jnp.transpose(x_nchw, (0, 2, 3, 1))

    def conv(x, w):
        return jax.lax.conv_general_dilated(
            x, w, window_strides=(1, 1), padding="SAME",
            dimension_numbers=("NHWC", "HWIO", "NHWC"))

    def inorm_lrelu(y):
        mean = jnp.mean(y, axis=(1, 2), keepdims=True)
        var = jnp.mean((y - mean) ** 2, axis=(1, 2), keepdims=True)
        y = (y - mean) / jnp.sqrt(var + EPS)
        return jnp.where(y >= 0, y, NEG_SLOPE * y)

    y = inorm_lrelu(conv(x, w1))
    y = inorm_lrelu(conv(y, w2))
    return jnp.transpose(y, (0, 3, 1, 2))


if __name__ == "__main__":
    # Small shapes implied by the module's forward: NCHW image input.
    N, Cin, Cout, H, W = 2, 4, 8, 16, 16

    key = jax.random.PRNGKey(0)
    kx, k1, k2 = jax.random.split(key, 3)
    x = jax.random.normal(kx, (N, Cin, H, W), dtype=jnp.float32)
    # Deterministic synthetic weights (HWIO layout), bias=False in the module.
    w1 = 0.1 * jax.random.normal(k1, (3, 3, Cin, Cout), dtype=jnp.float32)
    w2 = 0.1 * jax.random.normal(k2, (3, 3, Cout, Cout), dtype=jnp.float32)

    ref = jax.block_until_ready(conv_block_ref(x, w1, w2))

    # Full-precision MXU operands: tight check against the XLA reference.
    out_f32 = jax.block_until_ready(
        conv_block_pallas(x, w1, w2, mxu_dtype=jnp.float32))
    assert out_f32.shape == (N, Cout, H, W)
    err_f32 = float(jnp.max(jnp.abs(out_f32 - ref)))
    assert err_f32 < 2e-3, f"f32 max abs err = {err_f32}"

    # bf16 MXU operands (v6e/v7x fast path; f32 accumulation + f32 norm):
    # tolerance re-derived for bf16 operand rounding.
    out_bf16 = jax.block_until_ready(
        conv_block_pallas(x, w1, w2, mxu_dtype=jnp.bfloat16))
    err_bf16 = float(jnp.max(jnp.abs(out_bf16 - ref)))
    assert err_bf16 < 6e-2, f"bf16 max abs err = {err_bf16}"

    print("KERNEL_OK")
</pallas_src>

<mosaic_0001>
module attributes {stable_mosaic.version = 11 : i64} {
  func.func @_conv_block_kernel(%arg0: i32, %arg1: memref<2x16x64xf32, #tpu.memory_space<vmem>>, %arg2: memref<192x128xf32, #tpu.memory_space<vmem>>, %arg3: memref<384x128xf32, #tpu.memory_space<vmem>>, %arg4: memref<2x16x128xf32, #tpu.memory_space<vmem>>, %arg5: memref<36x64xf32, #tpu.memory_space<vmem>>, %arg6: memref<36x128xf32, #tpu.memory_space<vmem>>) attributes {dimension_semantics = [#tpu.dimension_semantics<parallel>], iteration_bounds = array<i64: 1>, scalar_prefetch = 0 : i64, scratch_operands = 2 : i64, tpu.core_type = #tpu.core_type<tc>, window_params = [{transform_indices = @transform_0, window_bounds = array<i64: 2, 16, 64>}, {pipeline_mode = #tpu.pipeline_mode<synchronous>, transform_indices = @transform_1, window_bounds = array<i64: 192, 128>}, {pipeline_mode = #tpu.pipeline_mode<synchronous>, transform_indices = @transform_2, window_bounds = array<i64: 384, 128>}, {transform_indices = @transform_3, window_bounds = array<i64: 2, 16, 128>}]} {
    %cst = arith.constant 0.000000e+00 : f32
    %0 = vector.broadcast %cst : f32 to vector<1x64xf32>
    %cst_0 = arith.constant 0.000000e+00 : f32
    %1 = vector.broadcast %cst_0 : f32 to vector<1x128xf32>
    %c0 = arith.constant 0 : index
    %c0_1 = arith.constant 0 : index
    %2 = vector.load %arg5[%c0, %c0_1] : memref<36x64xf32, #tpu.memory_space<vmem>>, vector<1x64xf32>
    tpu.vector_store %arg5[%c0, %c0_1], %0 {strides = array<i32>} : memref<36x64xf32, #tpu.memory_space<vmem>>, vector<1x64xf32>,
    %c0_2 = arith.constant 0 : index
    %c0_3 = arith.constant 0 : index
    %c0_4 = arith.constant 0 : index
    %3 = vector.load %arg1[%c0_2, %c0_3, %c0_4] : memref<2x16x64xf32, #tpu.memory_space<vmem>>, vector<1x16x64xf32>
    %4 = vector.shape_cast %3 : vector<1x16x64xf32> to vector<16x64xf32>
    %c1 = arith.constant 1 : index
    %c0_5 = arith.constant 0 : index
    %5 = vector.load %arg5[%c1, %c0_5] : memref<36x64xf32, #tpu.memory_space<vmem>>, vector<16x64xf32>
    tpu.vector_store %arg5[%c1, %c0_5], %4 {strides = array<i32>} : memref<36x64xf32, #tpu.memory_space<vmem>>, vector<16x64xf32>,
    %c17 = arith.constant 17 : index
    %c0_6 = arith.constant 0 : index
    %6 = vector.load %arg5[%c17, %c0_6] : memref<36x64xf32, #tpu.memory_space<vmem>>, vector<1x64xf32>
    tpu.vector_store %arg5[%c17, %c0_6], %0 {strides = array<i32>} : memref<36x64xf32, #tpu.memory_space<vmem>>, vector<1x64xf32>,
    %c18 = arith.constant 18 : index
    %c0_7 = arith.constant 0 : index
    %7 = vector.load %arg5[%c18, %c0_7] : memref<36x64xf32, #tpu.memory_space<vmem>>, vector<1x64xf32>
    tpu.vector_store %arg5[%c18, %c0_7], %0 {strides = array<i32>} : memref<36x64xf32, #tpu.memory_space<vmem>>, vector<1x64xf32>,
    %c1_8 = arith.constant 1 : index
    %c0_9 = arith.constant 0 : index
    %c0_10 = arith.constant 0 : index
    %8 = vector.load %arg1[%c1_8, %c0_9, %c0_10] : memref<2x16x64xf32, #tpu.memory_space<vmem>>, vector<1x16x64xf32>
    %9 = vector.shape_cast %8 : vector<1x16x64xf32> to vector<16x64xf32>
    %c19 = arith.constant 19 : index
    %c0_11 = arith.constant 0 : index
    %10 = vector.load %arg5[%c19, %c0_11] : memref<36x64xf32, #tpu.memory_space<vmem>>, vector<16x64xf32>
    tpu.vector_store %arg5[%c19, %c0_11], %9 {strides = array<i32>} : memref<36x64xf32, #tpu.memory_space<vmem>>, vector<16x64xf32>,
    %c35 = arith.constant 35 : index
    %c0_12 = arith.constant 0 : index
    %11 = vector.load %arg5[%c35, %c0_12] : memref<36x64xf32, #tpu.memory_space<vmem>>, vector<1x64xf32>
    tpu.vector_store %arg5[%c35, %c0_12], %0 {strides = array<i32>} : memref<36x64xf32, #tpu.memory_space<vmem>>, vector<1x64xf32>,
    %c0_13 = arith.constant 0 : index
    %c0_14 = arith.constant 0 : index
    %12 = vector.load %arg5[%c0_13, %c0_14] : memref<36x64xf32, #tpu.memory_space<vmem>>, vector<34x64xf32>
    %c1_15 = arith.constant 1 : index
    %c0_16 = arith.constant 0 : index
    %13 = vector.load %arg5[%c1_15, %c0_16] : memref<36x64xf32, #tpu.memory_space<vmem>>, vector<34x64xf32>
    %c2 = arith.constant 2 : index
    %c0_17 = arith.constant 0 : index
    %14 = vector.load %arg5[%c2, %c0_17] : memref<36x64xf32, #tpu.memory_space<vmem>>, vector<34x64xf32>
    %15 = tpu.concatenate %12, %13, %14 in 1 : vector<34x64xf32>, vector<34x64xf32>, vector<34x64xf32> -> vector<34x192xf32>
    %c0_18 = arith.constant 0 : index
    %c0_19 = arith.constant 0 : index
    %16 = vector.load %arg2[%c0_18, %c0_19] : memref<192x128xf32, #tpu.memory_space<vmem>>, vector<192x128xf32>
    %cst_20 = arith.constant dense<0.000000e+00> : vector<34x128xf32>
    %17 = tpu.matmul %15, %16, %cst_20 {dimension_numbers = #tpu.dot_dimension_numbers<[1], [0], [0], [1], [0, 0, 1, 1], [], []>} : vector<34x192xf32>, vector<192x128xf32>, vector<34x128xf32> -> vector<34x128xf32>
    %18 = vector.extract_strided_slice %17 {offsets = [0, 0], sizes = [16, 128], strides = [1, 1]} : vector<34x128xf32> to vector<16x128xf32>
    %19 = vector.extract_strided_slice %17 {offsets = [18, 0], sizes = [16, 128], strides = [1, 1]} : vector<34x128xf32> to vector<16x128xf32>
    %cst_21 = arith.constant dense<0.000000e+00> : vector<128xf32>
    %20 = vector.multi_reduction <add>, %18, %cst_21 [0] : vector<16x128xf32> to vector<128xf32>
    %21 = vector.shape_cast %20 : vector<128xf32> to vector<1x128xf32>
    %22 = arith.mulf %18, %18 : vector<16x128xf32>
    %cst_22 = arith.constant dense<0.000000e+00> : vector<128xf32>
    %23 = vector.multi_reduction <add>, %22, %cst_22 [0] : vector<16x128xf32> to vector<128xf32>
    %24 = vector.shape_cast %23 : vector<128xf32> to vector<1x128xf32>
    %cst_23 = arith.constant dense<0.000000e+00> : vector<128xf32>
    %25 = vector.multi_reduction <add>, %19, %cst_23 [0] : vector<16x128xf32> to vector<128xf32>
    %26 = vector.shape_cast %25 : vector<128xf32> to vector<1x128xf32>
    %27 = arith.mulf %19, %19 : vector<16x128xf32>
    %cst_24 = arith.constant dense<0.000000e+00> : vector<128xf32>
    %28 = vector.multi_reduction <add>, %27, %cst_24 [0] : vector<16x128xf32> to vector<128xf32>
    %29 = vector.shape_cast %28 : vector<128xf32> to vector<1x128xf32>
    %30 = tpu.concatenate %21, %24, %26, %29 in 0 : vector<1x128xf32>, vector<1x128xf32>, vector<1x128xf32>, vector<1x128xf32> -> vector<4x128xf32>
    %c8_i32 = arith.constant 8 : i32
    %31 = tpu.dynamic_rotate %30 by %c8_i32 dim 1 : vector<4x128xf32>, i32 -> vector<4x128xf32>
    %32 = arith.addf %30, %31 : vector<4x128xf32>
    %c16_i32 = arith.constant 16 : i32
    %33 = tpu.dynamic_rotate %32 by %c16_i32 dim 1 : vector<4x128xf32>, i32 -> vector<4x128xf32>
    %34 = arith.addf %32, %33 : vector<4x128xf32>
    %c32_i32 = arith.constant 32 : i32
    %35 = tpu.dynamic_rotate %34 by %c32_i32 dim 1 : vector<4x128xf32>, i32 -> vector<4x128xf32>
    %36 = arith.addf %34, %35 : vector<4x128xf32>
    %c64_i32 = arith.constant 64 : i32
    %37 = tpu.dynamic_rotate %36 by %c64_i32 dim 1 : vector<4x128xf32>, i32 -> vector<4x128xf32>
    %38 = arith.addf %36, %37 : vector<4x128xf32>
    %39 = vector.extract_strided_slice %38 {offsets = [0, 0], sizes = [1, 128], strides = [1, 1]} : vector<4x128xf32> to vector<1x128xf32>
    %cst_25 = arith.constant 3.906250e-03 : f32
    %40 = vector.broadcast %cst_25 : f32 to vector<1x128xf32>
    %41 = arith.mulf %39, %40 : vector<1x128xf32>
    %42 = vector.extract_strided_slice %38 {offsets = [1, 0], sizes = [1, 128], strides = [1, 1]} : vector<4x128xf32> to vector<1x128xf32>
    %cst_26 = arith.constant 3.906250e-03 : f32
    %43 = vector.broadcast %cst_26 : f32 to vector<1x128xf32>
    %44 = arith.mulf %42, %43 : vector<1x128xf32>
    %45 = arith.mulf %41, %41 : vector<1x128xf32>
    %46 = arith.subf %44, %45 : vector<1x128xf32>
    %cst_27 = arith.constant 0.000000e+00 : f32
    %47 = vector.broadcast %cst_27 : f32 to vector<1x128xf32>
    %48 = arith.maximumf %46, %47 : vector<1x128xf32>
    %49 = vector.broadcast %41 : vector<1x128xf32> to vector<16x128xf32>
    %50 = arith.subf %18, %49 : vector<16x128xf32>
    %cst_28 = arith.constant 9.99999974E-6 : f32
    %51 = vector.broadcast %cst_28 : f32 to vector<1x128xf32>
    %52 = arith.addf %48, %51 : vector<1x128xf32>
    %53 = math.rsqrt %52 : vector<1x128xf32>
    %54 = vector.broadcast %53 : vector<1x128xf32> to vector<16x128xf32>
    %55 = arith.mulf %50, %54 : vector<16x128xf32>
    %cst_29 = arith.constant 0.000000e+00 : f32
    %56 = vector.broadcast %cst_29 : f32 to vector<16x128xf32>
    %57 = arith.cmpf oge, %55, %56 : vector<16x128xf32>
    %cst_30 = arith.constant 2.000000e-01 : f32
    %58 = vector.broadcast %cst_30 : f32 to vector<16x128xf32>
    %59 = arith.mulf %58, %55 : vector<16x128xf32>
    %60 = arith.select %57, %55, %59 : vector<16x128xi1>, vector<16x128xf32>
    %61 = vector.extract_strided_slice %38 {offsets = [2, 0], sizes = [1, 128], strides = [1, 1]} : vector<4x128xf32> to vector<1x128xf32>
    %cst_31 = arith.constant 3.906250e-03 : f32
    %62 = vector.broadcast %cst_31 : f32 to vector<1x128xf32>
    %63 = arith.mulf %61, %62 : vector<1x128xf32>
    %64 = vector.extract_strided_slice %38 {offsets = [3, 0], sizes = [1, 128], strides = [1, 1]} : vector<4x128xf32> to vector<1x128xf32>
    %cst_32 = arith.constant 3.906250e-03 : f32
    %65 = vector.broadcast %cst_32 : f32 to vector<1x128xf32>
    %66 = arith.mulf %64, %65 : vector<1x128xf32>
    %67 = arith.mulf %63, %63 : vector<1x128xf32>
    %68 = arith.subf %66, %67 : vector<1x128xf32>
    %cst_33 = arith.constant 0.000000e+00 : f32
    %69 = vector.broadcast %cst_33 : f32 to vector<1x128xf32>
    %70 = arith.maximumf %68, %69 : vector<1x128xf32>
    %71 = vector.broadcast %63 : vector<1x128xf32> to vector<16x128xf32>
    %72 = arith.subf %19, %71 : vector<16x128xf32>
    %cst_34 = arith.constant 9.99999974E-6 : f32
    %73 = vector.broadcast %cst_34 : f32 to vector<1x128xf32>
    %74 = arith.addf %70, %73 : vector<1x128xf32>
    %75 = math.rsqrt %74 : vector<1x128xf32>
    %76 = vector.broadcast %75 : vector<1x128xf32> to vector<16x128xf32>
    %77 = arith.mulf %72, %76 : vector<16x128xf32>
    %cst_35 = arith.constant 0.000000e+00 : f32
    %78 = vector.broadcast %cst_35 : f32 to vector<16x128xf32>
    %79 = arith.cmpf oge, %77, %78 : vector<16x128xf32>
    %cst_36 = arith.constant 2.000000e-01 : f32
    %80 = vector.broadcast %cst_36 : f32 to vector<16x128xf32>
    %81 = arith.mulf %80, %77 : vector<16x128xf32>
    %82 = arith.select %79, %77, %81 : vector<16x128xi1>, vector<16x128xf32>
    %c0_37 = arith.constant 0 : index
    %c0_38 = arith.constant 0 : index
    %83 = vector.load %arg6[%c0_37, %c0_38] : memref<36x128xf32, #tpu.memory_space<vmem>>, vector<1x128xf32>
    tpu.vector_store %arg6[%c0_37, %c0_38], %1 {strides = array<i32>} : memref<36x128xf32, #tpu.memory_space<vmem>>, vector<1x128xf32>,
    %c1_39 = arith.constant 1 : index
    %c0_40 = arith.constant 0 : index
    %84 = vector.load %arg6[%c1_39, %c0_40] : memref<36x128xf32, #tpu.memory_space<vmem>>, vector<16x128xf32>
    tpu.vector_store %arg6[%c1_39, %c0_40], %60 {strides = array<i32>} : memref<36x128xf32, #tpu.memory_space<vmem>>, vector<16x128xf32>,
    %c17_41 = arith.constant 17 : index
    %c0_42 = arith.constant 0 : index
    %85 = vector.load %arg6[%c17_41, %c0_42] : memref<36x128xf32, #tpu.memory_space<vmem>>, vector<1x128xf32>
    tpu.vector_store %arg6[%c17_41, %c0_42], %1 {strides = array<i32>} : memref<36x128xf32, #tpu.memory_space<vmem>>, vector<1x128xf32>,
    %c18_43 = arith.constant 18 : index
    %c0_44 = arith.constant 0 : index
    %86 = vector.load %arg6[%c18_43, %c0_44] : memref<36x128xf32, #tpu.memory_space<vmem>>, vector<1x128xf32>
    tpu.vector_store %arg6[%c18_43, %c0_44], %1 {strides = array<i32>} : memref<36x128xf32, #tpu.memory_space<vmem>>, vector<1x128xf32>,
    %c19_45 = arith.constant 19 : index
    %c0_46 = arith.constant 0 : index
    %87 = vector.load %arg6[%c19_45, %c0_46] : memref<36x128xf32, #tpu.memory_space<vmem>>, vector<16x128xf32>
    tpu.vector_store %arg6[%c19_45, %c0_46], %82 {strides = array<i32>} : memref<36x128xf32, #tpu.memory_space<vmem>>, vector<16x128xf32>,
    %c35_47 = arith.constant 35 : index
    %c0_48 = arith.constant 0 : index
    %88 = vector.load %arg6[%c35_47, %c0_48] : memref<36x128xf32, #tpu.memory_space<vmem>>, vector<1x128xf32>
    tpu.vector_store %arg6[%c35_47, %c0_48], %1 {strides = array<i32>} : memref<36x128xf32, #tpu.memory_space<vmem>>, vector<1x128xf32>,
    %c0_49 = arith.constant 0 : index
    %c0_50 = arith.constant 0 : index
    %89 = vector.load %arg6[%c0_49, %c0_50] : memref<36x128xf32, #tpu.memory_space<vmem>>, vector<34x128xf32>
    %c1_51 = arith.constant 1 : index
    %c0_52 = arith.constant 0 : index
    %90 = vector.load %arg6[%c1_51, %c0_52] : memref<36x128xf32, #tpu.memory_space<vmem>>, vector<34x128xf32>
    %c2_53 = arith.constant 2 : index
    %c0_54 = arith.constant 0 : index
    %91 = vector.load %arg6[%c2_53, %c0_54] : memref<36x128xf32, #tpu.memory_space<vmem>>, vector<34x128xf32>
    %92 = tpu.concatenate %89, %90, %91 in 1 : vector<34x128xf32>, vector<34x128xf32>, vector<34x128xf32> -> vector<34x384xf32>
    %c0_55 = arith.constant 0 : index
    %c0_56 = arith.constant 0 : index
    %93 = vector.load %arg3[%c0_55, %c0_56] : memref<384x128xf32, #tpu.memory_space<vmem>>, vector<384x128xf32>
    %cst_57 = arith.constant dense<0.000000e+00> : vector<34x128xf32>
    %94 = tpu.matmul %92, %93, %cst_57 {dimension_numbers = #tpu.dot_dimension_numbers<[1], [0], [0], [1], [0, 0, 1, 1], [], []>} : vector<34x384xf32>, vector<384x128xf32>, vector<34x128xf32> -> vector<34x128xf32>
    %95 = vector.extract_strided_slice %94 {offsets = [0, 0], sizes = [16, 128], strides = [1, 1]} : vector<34x128xf32> to vector<16x128xf32>
    %96 = vector.extract_strided_slice %94 {offsets = [18, 0], sizes = [16, 128], strides = [1, 1]} : vector<34x128xf32> to vector<16x128xf32>
    %cst_58 = arith.constant dense<0.000000e+00> : vector<128xf32>
    %97 = vector.multi_reduction <add>, %95, %cst_58 [0] : vector<16x128xf32> to vector<128xf32>
    %98 = vector.shape_cast %97 : vector<128xf32> to vector<1x128xf32>
    %99 = arith.mulf %95, %95 : vector<16x128xf32>
    %cst_59 = arith.constant dense<0.000000e+00> : vector<128xf32>
    %100 = vector.multi_reduction <add>, %99, %cst_59 [0] : vector<16x128xf32> to vector<128xf32>
    %101 = vector.shape_cast %100 : vector<128xf32> to vector<1x128xf32>
    %cst_60 = arith.constant dense<0.000000e+00> : vector<128xf32>
    %102 = vector.multi_reduction <add>, %96, %cst_60 [0] : vector<16x128xf32> to vector<128xf32>
    %103 = vector.shape_cast %102 : vector<128xf32> to vector<1x128xf32>
    %104 = arith.mulf %96, %96 : vector<16x128xf32>
    %cst_61 = arith.constant dense<0.000000e+00> : vector<128xf32>
    %105 = vector.multi_reduction <add>, %104, %cst_61 [0] : vector<16x128xf32> to vector<128xf32>
    %106 = vector.shape_cast %105 : vector<128xf32> to vector<1x128xf32>
    %107 = tpu.concatenate %98, %101, %103, %106 in 0 : vector<1x128xf32>, vector<1x128xf32>, vector<1x128xf32>, vector<1x128xf32> -> vector<4x128xf32>
    %c8_i32_62 = arith.constant 8 : i32
    %108 = tpu.dynamic_rotate %107 by %c8_i32_62 dim 1 : vector<4x128xf32>, i32 -> vector<4x128xf32>
    %109 = arith.addf %107, %108 : vector<4x128xf32>
    %c16_i32_63 = arith.constant 16 : i32
    %110 = tpu.dynamic_rotate %109 by %c16_i32_63 dim 1 : vector<4x128xf32>, i32 -> vector<4x128xf32>
    %111 = arith.addf %109, %110 : vector<4x128xf32>
    %c32_i32_64 = arith.constant 32 : i32
    %112 = tpu.dynamic_rotate %111 by %c32_i32_64 dim 1 : vector<4x128xf32>, i32 -> vector<4x128xf32>
    %113 = arith.addf %111, %112 : vector<4x128xf32>
    %c64_i32_65 = arith.constant 64 : i32
    %114 = tpu.dynamic_rotate %113 by %c64_i32_65 dim 1 : vector<4x128xf32>, i32 -> vector<4x128xf32>
    %115 = arith.addf %113, %114 : vector<4x128xf32>
    %116 = vector.extract_strided_slice %115 {offsets = [0, 0], sizes = [1, 128], strides = [1, 1]} : vector<4x128xf32> to vector<1x128xf32>
    %cst_66 = arith.constant 3.906250e-03 : f32
    %117 = vector.broadcast %cst_66 : f32 to vector<1x128xf32>
    %118 = arith.mulf %116, %117 : vector<1x128xf32>
    %119 = vector.extract_strided_slice %115 {offsets = [1, 0], sizes = [1, 128], strides = [1, 1]} : vector<4x128xf32> to vector<1x128xf32>
    %cst_67 = arith.constant 3.906250e-03 : f32
    %120 = vector.broadcast %cst_67 : f32 to vector<1x128xf32>
    %121 = arith.mulf %119, %120 : vector<1x128xf32>
    %122 = arith.mulf %118, %118 : vector<1x128xf32>
    %123 = arith.subf %121, %122 : vector<1x128xf32>
    %cst_68 = arith.constant 0.000000e+00 : f32
    %124 = vector.broadcast %cst_68 : f32 to vector<1x128xf32>
    %125 = arith.maximumf %123, %124 : vector<1x128xf32>
    %126 = vector.broadcast %118 : vector<1x128xf32> to vector<16x128xf32>
    %127 = arith.subf %95, %126 : vector<16x128xf32>
    %cst_69 = arith.constant 9.99999974E-6 : f32
    %128 = vector.broadcast %cst_69 : f32 to vector<1x128xf32>
    %129 = arith.addf %125, %128 : vector<1x128xf32>
    %130 = math.rsqrt %129 : vector<1x128xf32>
    %131 = vector.broadcast %130 : vector<1x128xf32> to vector<16x128xf32>
    %132 = arith.mulf %127, %131 : vector<16x128xf32>
    %cst_70 = arith.constant 0.000000e+00 : f32
    %133 = vector.broadcast %cst_70 : f32 to vector<16x128xf32>
    %134 = arith.cmpf oge, %132, %133 : vector<16x128xf32>
    %cst_71 = arith.constant 2.000000e-01 : f32
    %135 = vector.broadcast %cst_71 : f32 to vector<16x128xf32>
    %136 = arith.mulf %135, %132 : vector<16x128xf32>
    %137 = arith.select %134, %132, %136 : vector<16x128xi1>, vector<16x128xf32>
    %138 = vector.extract_strided_slice %115 {offsets = [2, 0], sizes = [1, 128], strides = [1, 1]} : vector<4x128xf32> to vector<1x128xf32>
    %cst_72 = arith.constant 3.906250e-03 : f32
    %139 = vector.broadcast %cst_72 : f32 to vector<1x128xf32>
    %140 = arith.mulf %138, %139 : vector<1x128xf32>
    %141 = vector.extract_strided_slice %115 {offsets = [3, 0], sizes = [1, 128], strides = [1, 1]} : vector<4x128xf32> to vector<1x128xf32>
    %cst_73 = arith.constant 3.906250e-03 : f32
    %142 = vector.broadcast %cst_73 : f32 to vector<1x128xf32>
    %143 = arith.mulf %141, %142 : vector<1x128xf32>
    %144 = arith.mulf %140, %140 : vector<1x128xf32>
    %145 = arith.subf %143, %144 : vector<1x128xf32>
    %cst_74 = arith.constant 0.000000e+00 : f32
    %146 = vector.broadcast %cst_74 : f32 to vector<1x128xf32>
    %147 = arith.maximumf %145, %146 : vector<1x128xf32>
    %148 = vector.broadcast %140 : vector<1x128xf32> to vector<16x128xf32>
    %149 = arith.subf %96, %148 : vector<16x128xf32>
    %cst_75 = arith.constant 9.99999974E-6 : f32
    %150 = vector.broadcast %cst_75 : f32 to vector<1x128xf32>
    %151 = arith.addf %147, %150 : vector<1x128xf32>
    %152 = math.rsqrt %151 : vector<1x128xf32>
    %153 = vector.broadcast %152 : vector<1x128xf32> to vector<16x128xf32>
    %154 = arith.mulf %149, %153 : vector<16x128xf32>
    %cst_76 = arith.constant 0.000000e+00 : f32
    %155 = vector.broadcast %cst_76 : f32 to vector<16x128xf32>
    %156 = arith.cmpf oge, %154, %155 : vector<16x128xf32>
    %cst_77 = arith.constant 2.000000e-01 : f32
    %157 = vector.broadcast %cst_77 : f32 to vector<16x128xf32>
    %158 = arith.mulf %157, %154 : vector<16x128xf32>
    %159 = arith.select %156, %154, %158 : vector<16x128xi1>, vector<16x128xf32>
    %c0_78 = arith.constant 0 : index
    %c0_79 = arith.constant 0 : index
    %c0_80 = arith.constant 0 : index
    %160 = vector.load %arg4[%c0_78, %c0_79, %c0_80] : memref<2x16x128xf32, #tpu.memory_space<vmem>>, vector<1x16x128xf32>
    %161 = vector.shape_cast %160 : vector<1x16x128xf32> to vector<16x128xf32>
    %162 = vector.shape_cast %137 : vector<16x128xf32> to vector<1x16x128xf32>
    tpu.vector_store %arg4[%c0_78, %c0_79, %c0_80], %162 {strides = array<i32>} : memref<2x16x128xf32, #tpu.memory_space<vmem>>, vector<1x16x128xf32>,
    %c1_81 = arith.constant 1 : index
    %c0_82 = arith.constant 0 : index
    %c0_83 = arith.constant 0 : index
    %163 = vector.load %arg4[%c1_81, %c0_82, %c0_83] : memref<2x16x128xf32, #tpu.memory_space<vmem>>, vector<1x16x128xf32>
    %164 = vector.shape_cast %163 : vector<1x16x128xf32> to vector<16x128xf32>
    %165 = vector.shape_cast %159 : vector<16x128xf32> to vector<1x16x128xf32>
    tpu.vector_store %arg4[%c1_81, %c0_82, %c0_83], %165 {strides = array<i32>} : memref<2x16x128xf32, #tpu.memory_space<vmem>>, vector<1x16x128xf32>,
    return
  }
  func.func @transform_0(%arg0: i32) -> (i32, i32, i32) {
    %c0_i32 = arith.constant 0 : i32
    %c0_i32_0 = arith.constant 0 : i32
    %c0_i32_1 = arith.constant 0 : i32
    return %arg0, %c0_i32, %c0_i32_0 : i32, i32, i32
  }
  func.func @transform_1(%arg0: i32) -> (i32, i32) {
    %c0_i32 = arith.constant 0 : i32
    %c0_i32_0 = arith.constant 0 : i32
    %c0_i32_1 = arith.constant 0 : i32
    return %c0_i32, %c0_i32_0 : i32, i32
  }
  func.func @transform_2(%arg0: i32) -> (i32, i32) {
    %c0_i32 = arith.constant 0 : i32
    %c0_i32_0 = arith.constant 0 : i32
    %c0_i32_1 = arith.constant 0 : i32
    return %c0_i32, %c0_i32_0 : i32, i32
  }
  func.func @transform_3(%arg0: i32) -> (i32, i32, i32) {
    %c0_i32 = arith.constant 0 : i32
    %c0_i32_0 = arith.constant 0 : i32
    %c0_i32_1 = arith.constant 0 : i32
    return %arg0, %c0_i32, %c0_i32_0 : i32, i32, i32
  }
}

</mosaic_0001>

<llo_original>
// kernel: tpu_custom_call.1
$region0: #{tpu_custom_call.1}
  #allocation0 [shape = 'u32[]', space=smem, size = 0x4, offset = 0x4, fixed_abs, tag = 'smem constant byte address 0x4 - core index']
  #allocation1 [shape = 'u32[144,128]{1,0:T(1,128)}', space=vmem, size = 0x12000, scoped, tag = 'internal scratch']
  #allocation2 [shape = 'f32[36,64]{1,0:T(8,128)}', space=vmem, size = 0x5000, scoped, tag = 'scratch operand']
  #allocation3 [shape = 'f32[36,128]{1,0:T(8,128)}', space=vmem, size = 0x5000, scoped, tag = 'scratch operand']
  %s0 = inlined_call_operand.hbm [shape: f32[2,16,64], index: 0, kind: input, shape index: {}]
  %s1 = inlined_call_operand.hbm [shape: f32[192,128], index: 1, kind: input, shape index: {}]
  %s2 = inlined_call_operand.hbm [shape: f32[384,128], index: 2, kind: input, shape index: {}]
  %s3 = inlined_call_operand.hbm [shape: f32[2,16,128], index: 3, kind: output, shape index: {}]
  %s4 = sld [smem:[#allocation0]]
  $region34: #{tpu_custom_call.1} parent=0
    _
  %s6 = ssub.s32 1, %s4
  %s7 = scalar_select 0, %s6, %s4
  $region1: #{tpu_custom_call.1} parent=0
    #allocation4 [shape = 'u8[16384]{0}', space=vmem, size = 0x4000, scoped, tag = 'input window, operand 0, single buffered']
    #allocation5 [shape = 's32[1]{0}', space=sflag, size = 0x4, scoped, tag = 'scoped memory for tpu_custom_call.1']
    #allocation6 [shape = 's32[1]{0}', space=sflag, size = 0x4, scoped, tag = 'scoped memory for tpu_custom_call.1']
    #allocation7 [shape = 'u8[98304]{0}', space=vmem, size = 0x18000, scoped, tag = 'input window, operand 1, single buffered']
    #allocation8 [shape = 's32[1]{0}', space=sflag, size = 0x4, scoped, tag = 'scoped memory for tpu_custom_call.1']
    #allocation9 [shape = 'u8[196608]{0}', space=vmem, size = 0x30000, scoped, tag = 'input window, operand 2, single buffered']
    #allocation10 [shape = 'u8[16384]{0}', space=vmem, size = 0x4000, scoped, tag = 'output window, operand 0, single buffered']
    %8 = vsyncpa [#allocation5], 0
    %9 = vsyncpa [#allocation8], 0
    %10 = vsyncpa [#allocation6], 0
    // Predicated region
    $region2: #{tpu_custom_call.1} parent=1 // pred_check
      _
    $region3: #{tpu_custom_call.1} parent=1 // pred_check_branch
      %12 = sbr.rel (0) target = $region5
    $region4: #{tpu_custom_call.1} parent=1 // pred_region
      %s14 = ssub.s32 512, 512
      %15 = vsyncadd [#allocation5], %s14
      %s16 = sshll.u32 [#allocation4], 4
      %s17 = int_to_ptr.vmem [resolvable:$true] %s16
      %22 = dma.hbm_to_vmem [thread:$0]  %s0, 512, %s17, [#allocation5], 128, 128, 8
    $region5: #{tpu_custom_call.1} parent=1 // pred_fallthru
      _
    // Predicated region
    $region6: #{tpu_custom_call.1} parent=1 // pred_check
      _
    $region7: #{tpu_custom_call.1} parent=1 // pred_check_branch
      %24 = sbr.rel (0) target = $region9
    $region8: #{tpu_custom_call.1} parent=1 // pred_region
      %s26 = ssub.s32 3072, 3072
      %27 = vsyncadd [#allocation8], %s26
      %s28 = sshll.u32 [#allocation7], 4
      %s29 = int_to_ptr.vmem [resolvable:$true] %s28
      %34 = dma.hbm_to_vmem [thread:$0]  %s1, 3072, %s29, [#allocation8], 128, 128, 8
    $region9: #{tpu_custom_call.1} parent=1 // pred_fallthru
      _
    // Predicated region
    $region10: #{tpu_custom_call.1} parent=1 // pred_check
      _
    $region11: #{tpu_custom_call.1} parent=1 // pred_check_branch
      %36 = sbr.rel (0) target = $region13
    $region12: #{tpu_custom_call.1} parent=1 // pred_region
      %s38 = ssub.s32 6144, 6144
      %39 = vsyncadd [#allocation8], %s38
      %s40 = sshll.u32 [#allocation9], 4
      %s41 = int_to_ptr.vmem [resolvable:$true] %s40
      %46 = dma.hbm_to_vmem [thread:$0]  %s2, 6144, %s41, [#allocation8], 128, 128, 8
    $region13: #{tpu_custom_call.1} parent=1 // pred_fallthru
      _
    // Predicated region
    $region14: #{tpu_custom_call.1} parent=1 // pred_check
      _
    $region15: #{tpu_custom_call.1} parent=1 // pred_check_branch
      %48 = sbr.rel (0) target = $region17
    $region16: #{tpu_custom_call.1} parent=1 // pred_region
      %49 = dma.done [#allocation5], 512
    $region17: #{tpu_custom_call.1} parent=1 // pred_fallthru
      _
    // Predicated region
    $region18: #{tpu_custom_call.1} parent=1 // pred_check
      _
    $region19: #{tpu_custom_call.1} parent=1 // pred_check_branch
      %51 = sbr.rel (0) target = $region21
    $region20: #{tpu_custom_call.1} parent=1 // pred_region
      %52 = dma.done [#allocation8], 3072
    $region21: #{tpu_custom_call.1} parent=1 // pred_fallthru
      _
    // Predicated region
    $region22: #{tpu_custom_call.1} parent=1 // pred_check
      _
    $region23: #{tpu_custom_call.1} parent=1 // pred_check_branch
      %54 = sbr.rel (0) target = $region25
    $region24: #{tpu_custom_call.1} parent=1 // pred_region
      %55 = dma.done [#allocation8], 6144
    $region25: #{tpu_custom_call.1} parent=1 // pred_fallthru
      _
    %vm56 = vcmask 516096
    %57 = vst.msk [vmem:[#allocation2] sm:$0x1] %vm56, 0.0
    %v58 = vld [vmem:[#allocation4] sm:$0xff]
    %v59 = vld [vmem:[#allocation4 + $0x8] sm:$0xff]
    %vm60 = vcmask 523264
    %61 = vst.msk [vmem:[#allocation2 + $0x1] sm:$0xff] %vm60, %v58
    %62 = vst.msk [vmem:[#allocation2 + $0x9] sm:$0xff] %vm60, %v59
    %63 = vst.msk [vmem:[#allocation2 + $0x11] sm:$0x1] %vm56, 0.0
    %64 = vst.msk [vmem:[#allocation2 + $0x12] sm:$0x1] %vm56, 0.0
    %s65 = scalar_lea.vmem [#allocation4], 16
    %v66 = vld [vmem:[%s65] sm:$0xff]
    %v67 = vld [vmem:[%s65 + $0x8] sm:$0xff]
    %68 = vst.msk [vmem:[#allocation2 + $0x13] sm:$0xff] %vm60, %v66
    %69 = vst.msk [vmem:[#allocation2 + $0x1b] sm:$0xff] %vm60, %v67
    %70 = vst.msk [vmem:[#allocation2 + $0x23] sm:$0x1] %vm56, 0.0
    %v71 = vld [vmem:[#allocation2] sm:$0xff]
    %v72 = vld [vmem:[#allocation2 + $0x8] sm:$0xff]
    %v73 = vld [vmem:[#allocation2 + $0x10] sm:$0xff]
    %v74 = vld [vmem:[#allocation2 + $0x18] sm:$0xff]
    %v75 = vld [vmem:[#allocation2 + $0x20] sm:$0x3]
    %v76 = vld [vmem:[#allocation2 + $0x1] sm:$0xff]
    %v77 = vld [vmem:[#allocation2 + $0x9] sm:$0xff]
    %v78 = vld [vmem:[#allocation2 + $0x11] sm:$0xff]
    %v79 = vld [vmem:[#allocation2 + $0x19] sm:$0xff]
    %v80 = vld [vmem:[#allocation2 + $0x21] sm:$0x3]
    %v81 = vld [vmem:[#allocation2 + $0x2] sm:$0xff]
    %v82 = vld [vmem:[#allocation2 + $0xa] sm:$0xff]
    %v83 = vld [vmem:[#allocation2 + $0x12] sm:$0xff]
    %v84 = vld [vmem:[#allocation2 + $0x1a] sm:$0xff]
    %v85 = vld [vmem:[#allocation2 + $0x22] sm:$0x3]
    %91 = vrot.lane.b32.xlu0 %v76, 64
    %v92 = vpop.permute.xlu0 %91
    %93 = vrot.lane.b32.xlu0 %v77, 64
    %v94 = vpop.permute.xlu0 %93
    %95 = vrot.lane.b32.xlu0 %v78, 64
    %v96 = vpop.permute.xlu0 %95
    %97 = vrot.lane.b32.xlu0 %v79, 64
    %v98 = vpop.permute.xlu0 %97
    %99 = vrot.lane.b32.xlu0 %v80, 64
    %v100 = vpop.permute.xlu0 %99
    %v106 = vsel %vm60, %v71, %v92
    %v107 = vsel %vm60, %v72, %v94
    %v108 = vsel %vm60, %v73, %v96
    %v109 = vsel %vm60, %v74, %v98
    %v110 = vsel %vm60, %v75, %v100
    %v111 = vld [vmem:[#allocation7] sm:$0xff]
    %v112 = vld [vmem:[#allocation7 + $0x8] sm:$0xff]
    %v113 = vld [vmem:[#allocation7 + $0x10] sm:$0xff]
    %v114 = vld [vmem:[#allocation7 + $0x18] sm:$0xff]
    %v115 = vld [vmem:[#allocation7 + $0x20] sm:$0xff]
    %v116 = vld [vmem:[#allocation7 + $0x28] sm:$0xff]
    %v117 = vld [vmem:[#allocation7 + $0x30] sm:$0xff]
    %v118 = vld [vmem:[#allocation7 + $0x38] sm:$0xff]
    %v119 = vld [vmem:[#allocation7 + $0x40] sm:$0xff]
    %v120 = vld [vmem:[#allocation7 + $0x48] sm:$0xff]
    %v121 = vld [vmem:[#allocation7 + $0x50] sm:$0xff]
    %v122 = vld [vmem:[#allocation7 + $0x58] sm:$0xff]
    %v123 = vld [vmem:[#allocation7 + $0x60] sm:$0xff]
    %v124 = vld [vmem:[#allocation7 + $0x68] sm:$0xff]
    %v125 = vld [vmem:[#allocation7 + $0x70] sm:$0xff]
    %v126 = vld [vmem:[#allocation7 + $0x78] sm:$0xff]
    %v127 = vld [vmem:[#allocation7 + $0x80] sm:$0xff]
    %v128 = vld [vmem:[#allocation7 + $0x88] sm:$0xff]
    %v129 = vld [vmem:[#allocation7 + $0x90] sm:$0xff]
    %v130 = vld [vmem:[#allocation7 + $0x98] sm:$0xff]
    %v131 = vld [vmem:[#allocation7 + $0xa0] sm:$0xff]
    %v132 = vld [vmem:[#allocation7 + $0xa8] sm:$0xff]
    %v133 = vld [vmem:[#allocation7 + $0xb0] sm:$0xff]
    %v134 = vld [vmem:[#allocation7 + $0xb8] sm:$0xff]
    %v136 = vsel %vm60, %v81, 0
    %v139 = vsel %vm60, %v82, 0
    %v142 = vsel %vm60, %v83, 0
    %v145 = vsel %vm60, %v84, 0
    %v148 = vsel %vm60, %v85, 0
    %150 = vmatprep.subr.mxu0 0.0
    %151 = vmatpush1.msra.mxu0 %v111
    %152 = vmatprep.subr.mxu0 0.0
    %153 = vmatpush1.msra.mxu0 %v112
    %154 = vmatprep.subr.mxu0 0.0
    %155 = vmatpush1.msra.mxu0 %v113
    %156 = vmatprep.subr.mxu0 0.0
    %157 = vmatpush1.msra.mxu0 %v114
    %158 = vmatprep.subr.mxu0 0.0
    %159 = vmatpush1.msra.mxu0 %v115
    %160 = vmatprep.subr.mxu0 0.0
    %161 = vmatpush1.msra.mxu0 %v116
    %162 = vmatprep.subr.mxu0 0.0
    %163 = vmatpush1.msra.mxu0 %v117
    %164 = vmatprep.subr.mxu0 0.0
    %165 = vmatpush1.msra.mxu0 %v118
    %166 = vmatprep.subr.mxu0 0.0
    %167 = vmatpush1.msra.mxu0 %v119
    %168 = vmatprep.subr.mxu0 0.0
    %169 = vmatpush1.msra.mxu0 %v120
    %170 = vmatprep.subr.mxu0 0.0
    %171 = vmatpush1.msra.mxu0 %v121
    %172 = vmatprep.subr.mxu0 0.0
    %173 = vmatpush1.msra.mxu0 %v122
    %174 = vmatprep.subr.mxu0 0.0
    %175 = vmatpush1.msra.mxu0 %v123
    %176 = vmatprep.subr.mxu0 0.0
    %177 = vmatpush1.msra.mxu0 %v124
    %178 = vmatprep.subr.mxu0 0.0
    %179 = vmatpush1.msra.mxu0 %v125
    %180 = vmatprep.subr.mxu0 0.0
    %181 = vmatpush1.msra.mxu0 %v126
    %182 = vmatprep.subr.mxu0 0.0
    %183 = vmatpush1.msra.mxu0 %v127
    %184 = vmatprep.subr.mxu0 0.0
    %185 = vmatpush1.msra.mxu0 %v128
    %186 = vmatprep.subr.mxu0 0.0
    %187 = vmatpush1.msra.mxu0 %v129
    %188 = vmatprep.subr.mxu0 0.0
    %189 = vmatpush1.msra.mxu0 %v130
    %190 = vmatprep.subr.mxu0 0.0
    %191 = vmatpush1.msra.mxu0 %v131
    %192 = vmatprep.subr.mxu0 0.0
    %193 = vmatpush1.msra.mxu0 %v132
    %194 = vmatprep.subr.mxu0 0.0
    %195 = vmatpush1.msra.mxu0 %v133
    %196 = vmatprep.subr.mxu0 0.0
    %197 = vmatpush1.msra.mxu0 %v134
    %198 = vmatprep.subr.mxu0 0.0
    %199 = vmatpush1.msra.mxu0 0.0
    %200 = vmatprep.subr.mxu0 0.0
    %201 = vmatpush1.msra.mxu0 0.0
    %202 = vmatprep.subr.mxu0 0.0
    %203 = vmatpush1.msra.mxu0 0.0
    %204 = vmatprep.subr.mxu0 0.0
    %205 = vmatpush1.msra.mxu0 0.0
    %206 = vmatprep.subr.mxu0 0.0
    %207 = vmatpush1.msra.mxu0 0.0
    %208 = vmatprep.subr.mxu0 0.0
    %209 = vmatpush1.msra.mxu0 0.0
    %210 = vmatprep.subr.mxu0 0.0
    %211 = vmatpush1.msra.mxu0 0.0
    %212 = vmatprep.subr.mxu0 0.0
    %213 = vmatpush1.msra.mxu0 0.0
    %214 = vmatprep.mubr.f32.mxu0 %v136
    %215 = vmatmul.mubr.f32.gmra.mrb[0].mxu0 %v106
    %v216 = vpop.f32.mrb[0].mxu0
    %v217 = vadd.f32 0.0, %v216
    %v218 = vpop.f32.mrb[0].mxu0
    %219 = vmatprep.mubr.f32.mxu0 %v139
    %220 = vmatmul.mubr.f32.gmra.mrb[0].mxu0 %v107
    %v221 = vpop.f32.mrb[0].mxu0
    %v222 = vadd.f32 0.0, %v221
    %v223 = vpop.f32.mrb[0].mxu0
    %224 = vmatprep.mubr.f32.mxu0 %v142
    %225 = vmatmul.mubr.f32.gmra.mrb[0].mxu0 %v108
    %v226 = vpop.f32.mrb[0].mxu0
    %v227 = vadd.f32 0.0, %v226
    %v228 = vpop.f32.mrb[0].mxu0
    %229 = vmatprep.mubr.f32.mxu0 %v145
    %230 = vmatmul.mubr.f32.gmra.mrb[0].mxu0 %v109
    %v231 = vpop.f32.mrb[0].mxu0
    %v232 = vadd.f32 0.0, %v231
    %v233 = vpop.f32.mrb[0].mxu0
    %234 = vmatprep.mubr.f32.mxu0 %v148
    %235 = vmatmul.mubr.f32.gmra.mrb[0].mxu0 %v110
    %v236 = vpop.f32.mrb[0].mxu0
    %v237 = vadd.f32 0.0, %v236
    %v238 = vpop.f32.mrb[0].mxu0
    %239 = vdwg.mxu0
    %v240 = vadd.f32 %v217, %v222
    %v241 = vrot.slane %v240, 4
    %v242 = vadd.f32 %v240, %v241
    %v243 = vrot.slane %v242, 2
    %v244 = vadd.f32 %v242, %v243
    %v245 = vrot.slane %v244, 1
    %v246 = vadd.f32 %v244, %v245
    %v247 = vmul.f32 %v217, %v217
    %v248 = vmul.f32 %v222, %v222
    %v249 = vadd.f32 %v247, %v248
    %v250 = vrot.slane %v249, 4
    %v251 = vadd.f32 %v249, %v250
    %v252 = vrot.slane %v251, 2
    %v253 = vadd.f32 %v251, %v252
    %v254 = vrot.slane %v253, 1
    %v255 = vadd.f32 %v253, %v254
    %vm259 = vcmask 1045504
    %v260 = vrot.slane %v227, 2
    %v261 = vrot.slane %v232, 2
    %v262 = vsel %vm259, %v260, %v261
    %v263 = vrot.slane %v237, 2
    %v264 = vsel %vm259, %v261, %v263
    %v267 = vadd.f32 %v262, %v264
    %v268 = vrot.slane %v267, 4
    %v269 = vadd.f32 %v267, %v268
    %v270 = vrot.slane %v269, 2
    %v271 = vadd.f32 %v269, %v270
    %v272 = vrot.slane %v271, 1
    %v273 = vadd.f32 %v271, %v272
    %v274 = vmul.f32 %v227, %v227
    %v275 = vmul.f32 %v232, %v232
    %v276 = vmul.f32 %v237, %v237
    %v280 = vrot.slane %v274, 2
    %v281 = vrot.slane %v275, 2
    %v282 = vsel %vm259, %v280, %v281
    %v283 = vrot.slane %v276, 2
    %v284 = vsel %vm259, %v281, %v283
    %v287 = vadd.f32 %v282, %v284
    %v288 = vrot.slane %v287, 4
    %v289 = vadd.f32 %v287, %v288
    %v290 = vrot.slane %v289, 2
    %v291 = vadd.f32 %v289, %v290
    %v292 = vrot.slane %v291, 1
    %v293 = vadd.f32 %v291, %v292
    %vm294 = vcmask 1040384
    %v295 = vsel %vm294, %v246, %v255
    %vm296 = vcmask 1041408
    %v297 = vsel %vm296, %v295, %v273
    %vm298 = vcmask 1042432
    %v299 = vsel %vm298, %v297, %v293
    %300 = vrot.lane.b32.xlu0 %v299, 8
    %v301 = vpop.permute.xlu0 %300
    %v302 = vadd.f32 %v299, %v301
    %303 = vrot.lane.b32.xlu0 %v302, 16
    %v304 = vpop.permute.xlu0 %303
    %v305 = vadd.f32 %v302, %v304
    %306 = vrot.lane.b32.xlu0 %v305, 32
    %v307 = vpop.permute.xlu0 %306
    %v308 = vadd.f32 %v305, %v307
    %309 = vrot.lane.b32.xlu0 %v308, 64
    %v310 = vpop.permute.xlu0 %309
    %v311 = vadd.f32 %v308, %v310
    %v312 = vmul.f32 %v311, 0.00390625
    %v313 = vmul.f32 %v312, %v312
    %v315 = vrot.slane %v313, 7
    %v317 = vsub.f32 %v312, %v315
    %v318 = vmax.f32 %v317, 0.0
    %v319 = vlaneseq
    %v320 = vshrl.u32 %v319, 7
    %v321 = vsub.s32 0, %v320
    %v322 = vrot.slane %v312, %v321
    %v323 = vsub.f32 %v217, %v322
    %v324 = vsub.f32 %v222, %v322
    %v325 = vadd.f32 %v318, 1e-05
    %v326 = vrsqrt.pop %v325
    %v327 = vlaneseq
    %v328 = vshrl.u32 %v327, 7
    %v329 = vsub.s32 1, %v328
    %v330 = vrot.slane %v326, %v329
    %v331 = vmul.f32 %v323, %v330
    %v332 = vmul.f32 %v324, %v330
    %vm333 = vcmp.ge.f32.partialorder %v331, 0.0
    %vm334 = vcmp.ge.f32.partialorder %v332, 0.0
    %v335 = vmul.f32 %v331, 0.2
    %v336 = vmul.f32 %v332, 0.2
    %v337 = vsel %vm333, %v331, %v335
    %v338 = vsel %vm334, %v332, %v336
    %v339 = vlaneseq
    %v340 = vshrl.u32 %v339, 7
    %v341 = vsub.s32 2, %v340
    %v342 = vrot.slane %v312, %v341
    %v343 = vsub.f32 %v227, %v342
    %v344 = vsub.f32 %v232, %v342
    %v345 = vsub.f32 %v237, %v342
    %v346 = vlaneseq
    %v347 = vshrl.u32 %v346, 7
    %v348 = vsub.s32 3, %v347
    %v349 = vrot.slane %v326, %v348
    %v350 = vmul.f32 %v343, %v349
    %v351 = vmul.f32 %v344, %v349
    %v352 = vmul.f32 %v345, %v349
    %vm353 = vcmp.ge.f32.partialorder %v350, 0.0
    %vm354 = vcmp.ge.f32.partialorder %v351, 0.0
    %vm355 = vcmp.ge.f32.partialorder %v352, 0.0
    %v356 = vmul.f32 %v350, 0.2
    %v357 = vmul.f32 %v351, 0.2
    %v358 = vmul.f32 %v352, 0.2
    %v359 = vsel %vm353, %v350, %v356
    %v360 = vsel %vm354, %v351, %v357
    %v361 = vsel %vm355, %v352, %v358
    %362 = vst [vmem:[#allocation3] sm:$0x1] 0.0
    %363 = vst [vmem:[#allocation3 + $0x1] sm:$0xff] %v337
    %364 = vst [vmem:[#allocation3 + $0x9] sm:$0xff] %v338
    %365 = vst [vmem:[#allocation3 + $0x11] sm:$0x1] 0.0
    %366 = vst [vmem:[#allocation3 + $0x12] sm:$0x1] 0.0
    %367 = vst [vmem:[#allocation3 + $0x11] sm:$0xfc] %v359
    %368 = vst [vmem:[#allocation3 + $0x19] sm:$0xff] %v360
    %369 = vst [vmem:[#allocation3 + $0x21] sm:$0x3] %v361
    %370 = vst [vmem:[#allocation3 + $0x23] sm:$0x1] 0.0
    %v371 = vld [vmem:[#allocation3] sm:$0xff]
    %v372 = vld [vmem:[#allocation3 + $0x8] sm:$0xff]
    %v373 = vld [vmem:[#allocation3 + $0x10] sm:$0xff]
    %v374 = vld [vmem:[#allocation3 + $0x18] sm:$0xff]
    %v375 = vld [vmem:[#allocation3 + $0x20] sm:$0x3]
    %v376 = vld [vmem:[#allocation3 + $0x1] sm:$0xff]
    %v377 = vld [vmem:[#allocation3 + $0x9] sm:$0xff]
    %v378 = vld [vmem:[#allocation3 + $0x11] sm:$0xff]
    %v379 = vld [vmem:[#allocation3 + $0x19] sm:$0xff]
    %v380 = vld [vmem:[#allocation3 + $0x21] sm:$0x3]
    %v381 = vld [vmem:[#allocation3 + $0x2] sm:$0xff]
    %v382 = vld [vmem:[#allocation3 + $0xa] sm:$0xff]
    %v383 = vld [vmem:[#allocation3 + $0x12] sm:$0xff]
    %v384 = vld [vmem:[#allocation3 + $0x1a] sm:$0xff]
    %v385 = vld [vmem:[#allocation3 + $0x22] sm:$0x3]
    %v386 = vld [vmem:[#allocation9] sm:$0xff]
    %v387 = vld [vmem:[#allocation9 + $0x8] sm:$0xff]
    %v388 = vld [vmem:[#allocation9 + $0x10] sm:$0xff]
    %v389 = vld [vmem:[#allocation9 + $0x18] sm:$0xff]
    %v390 = vld [vmem:[#allocation9 + $0x20] sm:$0xff]
    %v391 = vld [vmem:[#allocation9 + $0x28] sm:$0xff]
    %v392 = vld [vmem:[#allocation9 + $0x30] sm:$0xff]
    %v393 = vld [vmem:[#allocation9 + $0x38] sm:$0xff]
    %v394 = vld [vmem:[#allocation9 + $0x40] sm:$0xff]
    %v395 = vld [vmem:[#allocation9 + $0x48] sm:$0xff]
    %v396 = vld [vmem:[#allocation9 + $0x50] sm:$0xff]
    %v397 = vld [vmem:[#allocation9 + $0x58] sm:$0xff]
    %v398 = vld [vmem:[#allocation9 + $0x60] sm:$0xff]
    %v399 = vld [vmem:[#allocation9 + $0x68] sm:$0xff]
    %v400 = vld [vmem:[#allocation9 + $0x70] sm:$0xff]
    %v401 = vld [vmem:[#allocation9 + $0x78] sm:$0xff]
    %v402 = vld [vmem:[#allocation9 + $0x80] sm:$0xff]
    %v403 = vld [vmem:[#allocation9 + $0x88] sm:$0xff]
    %v404 = vld [vmem:[#allocation9 + $0x90] sm:$0xff]
    %v405 = vld [vmem:[#allocation9 + $0x98] sm:$0xff]
    %v406 = vld [vmem:[#allocation9 + $0xa0] sm:$0xff]
    %v407 = vld [vmem:[#allocation9 + $0xa8] sm:$0xff]
    %v408 = vld [vmem:[#allocation9 + $0xb0] sm:$0xff]
    %v409 = vld [vmem:[#allocation9 + $0xb8] sm:$0xff]
    %v410 = vld [vmem:[#allocation9 + $0xc0] sm:$0xff]
    %v411 = vld [vmem:[#allocation9 + $0xc8] sm:$0xff]
    %v412 = vld [vmem:[#allocation9 + $0xd0] sm:$0xff]
    %v413 = vld [vmem:[#allocation9 + $0xd8] sm:$0xff]
    %v414 = vld [vmem:[#allocation9 + $0xe0] sm:$0xff]
    %v415 = vld [vmem:[#allocation9 + $0xe8] sm:$0xff]
    %v416 = vld [vmem:[#allocation9 + $0xf0] sm:$0xff]
    %v417 = vld [vmem:[#allocation9 + $0xf8] sm:$0xff]
    %v418 = vld [vmem:[#allocation9 + $0x100] sm:$0xff]
    %v419 = vld [vmem:[#allocation9 + $0x108] sm:$0xff]
    %v420 = vld [vmem:[#allocation9 + $0x110] sm:$0xff]
    %v421 = vld [vmem:[#allocation9 + $0x118] sm:$0xff]
    %v422 = vld [vmem:[#allocation9 + $0x120] sm:$0xff]
    %v423 = vld [vmem:[#allocation9 + $0x128] sm:$0xff]
    %v424 = vld [vmem:[#allocation9 + $0x130] sm:$0xff]
    %v425 = vld [vmem:[#allocation9 + $0x138] sm:$0xff]
    %v426 = vld [vmem:[#allocation9 + $0x140] sm:$0xff]
    %v427 = vld [vmem:[#allocation9 + $0x148] sm:$0xff]
    %v428 = vld [vmem:[#allocation9 + $0x150] sm:$0xff]
    %v429 = vld [vmem:[#allocation9 + $0x158] sm:$0xff]
    %v430 = vld [vmem:[#allocation9 + $0x160] sm:$0xff]
    %v431 = vld [vmem:[#allocation9 + $0x168] sm:$0xff]
    %v432 = vld [vmem:[#allocation9 + $0x170] sm:$0xff]
    %v433 = vld [vmem:[#allocation9 + $0x178] sm:$0xff]
    %434 = vmatprep.subr.mxu0 0.0
    %435 = vmatpush1.msra.mxu0 %v386
    %436 = vmatprep.subr.mxu0 0.0
    %437 = vmatpush1.msra.mxu0 %v387
    %438 = vmatprep.subr.mxu0 0.0
    %439 = vmatpush1.msra.mxu0 %v388
    %440 = vmatprep.subr.mxu0 0.0
    %441 = vmatpush1.msra.mxu0 %v389
    %442 = vmatprep.subr.mxu0 0.0
    %443 = vmatpush1.msra.mxu0 %v390
    %444 = vmatprep.subr.mxu0 0.0
    %445 = vmatpush1.msra.mxu0 %v391
    %446 = vmatprep.subr.mxu0 0.0
    %447 = vmatpush1.msra.mxu0 %v392
    %448 = vmatprep.subr.mxu0 0.0
    %449 = vmatpush1.msra.mxu0 %v393
    %450 = vmatprep.subr.mxu0 0.0
    %451 = vmatpush1.msra.mxu0 %v394
    %452 = vmatprep.subr.mxu0 0.0
    %453 = vmatpush1.msra.mxu0 %v395
    %454 = vmatprep.subr.mxu0 0.0
    %455 = vmatpush1.msra.mxu0 %v396
    %456 = vmatprep.subr.mxu0 0.0
    %457 = vmatpush1.msra.mxu0 %v397
    %458 = vmatprep.subr.mxu0 0.0
    %459 = vmatpush1.msra.mxu0 %v398
    %460 = vmatprep.subr.mxu0 0.0
    %461 = vmatpush1.msra.mxu0 %v399
    %462 = vmatprep.subr.mxu0 0.0
    %463 = vmatpush1.msra.mxu0 %v400
    %464 = vmatprep.subr.mxu0 0.0
    %465 = vmatpush1.msra.mxu0 %v401
    %466 = vmatprep.subr.mxu0 0.0
    %467 = vmatpush1.msra.mxu0 %v402
    %468 = vmatprep.subr.mxu0 0.0
    %469 = vmatpush1.msra.mxu0 %v403
    %470 = vmatprep.subr.mxu0 0.0
    %471 = vmatpush1.msra.mxu0 %v404
    %472 = vmatprep.subr.mxu0 0.0
    %473 = vmatpush1.msra.mxu0 %v405
    %474 = vmatprep.subr.mxu0 0.0
    %475 = vmatpush1.msra.mxu0 %v406
    %476 = vmatprep.subr.mxu0 0.0
    %477 = vmatpush1.msra.mxu0 %v407
    %478 = vmatprep.subr.mxu0 0.0
    %479 = vmatpush1.msra.mxu0 %v408
    %480 = vmatprep.subr.mxu0 0.0
    %481 = vmatpush1.msra.mxu0 %v409
    %482 = vmatprep.subr.mxu0 0.0
    %483 = vmatpush1.msra.mxu0 %v410
    %484 = vmatprep.subr.mxu0 0.0
    %485 = vmatpush1.msra.mxu0 %v411
    %486 = vmatprep.subr.mxu0 0.0
    %487 = vmatpush1.msra.mxu0 %v412
    %488 = vmatprep.subr.mxu0 0.0
    %489 = vmatpush1.msra.mxu0 %v413
    %490 = vmatprep.subr.mxu0 0.0
    %491 = vmatpush1.msra.mxu0 %v414
    %492 = vmatprep.subr.mxu0 0.0
    %493 = vmatpush1.msra.mxu0 %v415
    %494 = vmatprep.subr.mxu0 0.0
    %495 = vmatpush1.msra.mxu0 %v416
    %496 = vmatprep.subr.mxu0 0.0
    %497 = vmatpush1.msra.mxu0 %v417
    %498 = vmatprep.mubr.f32.mxu0 %v376
    %499 = vmatmul.mubr.f32.gmra.mrb[0].mxu0 %v371
    %v500 = vpop.f32.mrb[0].mxu0
    %v501 = vadd.f32 0.0, %v500
    %v502 = vpop.f32.mrb[0].mxu0
    %503 = vmatprep.mubr.f32.mxu0 %v377
    %504 = vmatmul.mubr.f32.gmra.mrb[0].mxu0 %v372
    %v505 = vpop.f32.mrb[0].mxu0
    %v506 = vadd.f32 0.0, %v505
    %v507 = vpop.f32.mrb[0].mxu0
    %508 = vmatprep.mubr.f32.mxu0 %v378
    %509 = vmatmul.mubr.f32.gmra.mrb[0].mxu0 %v373
    %v510 = vpop.f32.mrb[0].mxu0
    %v511 = vadd.f32 0.0, %v510
    %v512 = vpop.f32.mrb[0].mxu0
    %513 = vmatprep.mubr.f32.mxu0 %v379
    %514 = vmatmul.mubr.f32.gmra.mrb[0].mxu0 %v374
    %v515 = vpop.f32.mrb[0].mxu0
    %v516 = vadd.f32 0.0, %v515
    %v517 = vpop.f32.mrb[0].mxu0
    %518 = vmatprep.mubr.f32.mxu0 %v380
    %519 = vmatmul.mubr.f32.gmra.mrb[0].mxu0 %v375
    %v520 = vpop.f32.mrb[0].mxu0
    %v521 = vadd.f32 0.0, %v520
    %v522 = vpop.f32.mrb[0].mxu0
    %523 = vdwg.mxu0
    %524 = vmatprep.subr.mxu0 0.0
    %525 = vmatpush1.msra.mxu0 %v418
    %526 = vmatprep.subr.mxu0 0.0
    %527 = vmatpush1.msra.mxu0 %v419
    %528 = vmatprep.subr.mxu0 0.0
    %529 = vmatpush1.msra.mxu0 %v420
    %530 = vmatprep.subr.mxu0 0.0
    %531 = vmatpush1.msra.mxu0 %v421
    %532 = vmatprep.subr.mxu0 0.0
    %533 = vmatpush1.msra.mxu0 %v422
    %534 = vmatprep.subr.mxu0 0.0
    %535 = vmatpush1.msra.mxu0 %v423
    %536 = vmatprep.subr.mxu0 0.0
    %537 = vmatpush1.msra.mxu0 %v424
    %538 = vmatprep.subr.mxu0 0.0
    %539 = vmatpush1.msra.mxu0 %v425
    %540 = vmatprep.subr.mxu0 0.0
    %541 = vmatpush1.msra.mxu0 %v426
    %542 = vmatprep.subr.mxu0 0.0
    %543 = vmatpush1.msra.mxu0 %v427
    %544 = vmatprep.subr.mxu0 0.0
    %545 = vmatpush1.msra.mxu0 %v428
    %546 = vmatprep.subr.mxu0 0.0
    %547 = vmatpush1.msra.mxu0 %v429
    %548 = vmatprep.subr.mxu0 0.0
    %549 = vmatpush1.msra.mxu0 %v430
    %550 = vmatprep.subr.mxu0 0.0
    %551 = vmatpush1.msra.mxu0 %v431
    %552 = vmatprep.subr.mxu0 0.0
    %553 = vmatpush1.msra.mxu0 %v432
    %554 = vmatprep.subr.mxu0 0.0
    %555 = vmatpush1.msra.mxu0 %v433
    %556 = vmatprep.subr.mxu0 0.0
    %557 = vmatpush1.msra.mxu0 0.0
    %558 = vmatprep.subr.mxu0 0.0
    %559 = vmatpush1.msra.mxu0 0.0
    %560 = vmatprep.subr.mxu0 0.0
    %561 = vmatpush1.msra.mxu0 0.0
    %562 = vmatprep.subr.mxu0 0.0
    %563 = vmatpush1.msra.mxu0 0.0
    %564 = vmatprep.subr.mxu0 0.0
    %565 = vmatpush1.msra.mxu0 0.0
    %566 = vmatprep.subr.mxu0 0.0
    %567 = vmatpush1.msra.mxu0 0.0
    %568 = vmatprep.subr.mxu0 0.0
    %569 = vmatpush1.msra.mxu0 0.0
    %570 = vmatprep.subr.mxu0 0.0
    %571 = vmatpush1.msra.mxu0 0.0
    %572 = vmatprep.subr.mxu0 0.0
    %573 = vmatpush1.msra.mxu0 0.0
    %574 = vmatprep.subr.mxu0 0.0
    %575 = vmatpush1.msra.mxu0 0.0
    %576 = vmatprep.subr.mxu0 0.0
    %577 = vmatpush1.msra.mxu0 0.0
    %578 = vmatprep.subr.mxu0 0.0
    %579 = vmatpush1.msra.mxu0 0.0
    %580 = vmatprep.subr.mxu0 0.0
    %581 = vmatpush1.msra.mxu0 0.0
    %582 = vmatprep.subr.mxu0 0.0
    %583 = vmatpush1.msra.mxu0 0.0
    %584 = vmatprep.subr.mxu0 0.0
    %585 = vmatpush1.msra.mxu0 0.0
    %586 = vmatprep.subr.mxu0 0.0
    %587 = vmatpush1.msra.mxu0 0.0
    %588 = vmatprep.mubr.f32.mxu0 0.0
    %589 = vmatmul.mubr.f32.gmra.mrb[0].mxu0 %v381
    %v590 = vpop.f32.mrb[0].mxu0
    %v591 = vadd.f32 %v501, %v590
    %v592 = vpop.f32.mrb[0].mxu0
    %593 = vmatprep.mubr.f32.mxu0 0.0
    %594 = vmatmul.mubr.f32.gmra.mrb[0].mxu0 %v382
    %v595 = vpop.f32.mrb[0].mxu0
    %v596 = vadd.f32 %v506, %v595
    %v597 = vpop.f32.mrb[0].mxu0
    %598 = vmatprep.mubr.f32.mxu0 0.0
    %599 = vmatmul.mubr.f32.gmra.mrb[0].mxu0 %v383
    %v600 = vpop.f32.mrb[0].mxu0
    %v601 = vadd.f32 %v511, %v600
    %v602 = vpop.f32.mrb[0].mxu0
    %603 = vmatprep.mubr.f32.mxu0 0.0
    %604 = vmatmul.mubr.f32.gmra.mrb[0].mxu0 %v384
    %v605 = vpop.f32.mrb[0].mxu0
    %v606 = vadd.f32 %v516, %v605
    %v607 = vpop.f32.mrb[0].mxu0
    %608 = vmatprep.mubr.f32.mxu0 0.0
    %609 = vmatmul.mubr.f32.gmra.mrb[0].mxu0 %v385
    %v610 = vpop.f32.mrb[0].mxu0
    %v611 = vadd.f32 %v521, %v610
    %v612 = vpop.f32.mrb[0].mxu0
    %613 = vdwg.mxu0
    %v614 = vadd.f32 %v591, %v596
    %v615 = vrot.slane %v614, 4
    %v616 = vadd.f32 %v614, %v615
    %v617 = vrot.slane %v616, 2
    %v618 = vadd.f32 %v616, %v617
    %v619 = vrot.slane %v618, 1
    %v620 = vadd.f32 %v618, %v619
    %v621 = vmul.f32 %v591, %v591
    %v622 = vmul.f32 %v596, %v596
    %v623 = vadd.f32 %v621, %v622
    %v624 = vrot.slane %v623, 4
    %v625 = vadd.f32 %v623, %v624
    %v626 = vrot.slane %v625, 2
    %v627 = vadd.f32 %v625, %v626
    %v628 = vrot.slane %v627, 1
    %v629 = vadd.f32 %v627, %v628
    %v633 = vrot.slane %v601, 2
    %v634 = vrot.slane %v606, 2
    %v635 = vsel %vm259, %v633, %v634
    %v636 = vrot.slane %v611, 2
    %v637 = vsel %vm259, %v634, %v636
    %v640 = vadd.f32 %v635, %v637
    %v641 = vrot.slane %v640, 4
    %v642 = vadd.f32 %v640, %v641
    %v643 = vrot.slane %v642, 2
    %v644 = vadd.f32 %v642, %v643
    %v645 = vrot.slane %v644, 1
    %v646 = vadd.f32 %v644, %v645
    %v647 = vmul.f32 %v601, %v601
    %v648 = vmul.f32 %v606, %v606
    %v649 = vmul.f32 %v611, %v611
    %v653 = vrot.slane %v647, 2
    %v654 = vrot.slane %v648, 2
    %v655 = vsel %vm259, %v653, %v654
    %v656 = vrot.slane %v649, 2
    %v657 = vsel %vm259, %v654, %v656
    %v660 = vadd.f32 %v655, %v657
    %v661 = vrot.slane %v660, 4
    %v662 = vadd.f32 %v660, %v661
    %v663 = vrot.slane %v662, 2
    %v664 = vadd.f32 %v662, %v663
    %v665 = vrot.slane %v664, 1
    %v666 = vadd.f32 %v664, %v665
    %v667 = vsel %vm294, %v620, %v629
    %v668 = vsel %vm296, %v667, %v646
    %v669 = vsel %vm298, %v668, %v666
    %670 = vrot.lane.b32.xlu0 %v669, 8
    %v671 = vpop.permute.xlu0 %670
    %v672 = vadd.f32 %v669, %v671
    %673 = vrot.lane.b32.xlu0 %v672, 16
    %v674 = vpop.permute.xlu0 %673
    %v675 = vadd.f32 %v672, %v674
    %676 = vrot.lane.b32.xlu0 %v675, 32
    %v677 = vpop.permute.xlu0 %676
    %v678 = vadd.f32 %v675, %v677
    %679 = vrot.lane.b32.xlu0 %v678, 64
    %v680 = vpop.permute.xlu0 %679
    %v681 = vadd.f32 %v678, %v680
    %v682 = vmul.f32 %v681, 0.00390625
    %v683 = vmul.f32 %v682, %v682
    %v685 = vrot.slane %v683, 7
    %v687 = vsub.f32 %v682, %v685
    %v688 = vmax.f32 %v687, 0.0
    %v689 = vlaneseq
    %v690 = vshrl.u32 %v689, 7
    %v691 = vsub.s32 0, %v690
    %v692 = vrot.slane %v682, %v691
    %v693 = vsub.f32 %v591, %v692
    %v694 = vsub.f32 %v596, %v692
    %v695 = vadd.f32 %v688, 1e-05
    %v696 = vrsqrt.pop %v695
    %v697 = vlaneseq
    %v698 = vshrl.u32 %v697, 7
    %v699 = vsub.s32 1, %v698
    %v700 = vrot.slane %v696, %v699
    %v701 = vmul.f32 %v693, %v700
    %v702 = vmul.f32 %v694, %v700
    %vm703 = vcmp.ge.f32.partialorder %v701, 0.0
    %vm704 = vcmp.ge.f32.partialorder %v702, 0.0
    %v705 = vmul.f32 %v701, 0.2
    %v706 = vmul.f32 %v702, 0.2
    %v707 = vsel %vm703, %v701, %v705
    %v708 = vsel %vm704, %v702, %v706
    %v709 = vlaneseq
    %v710 = vshrl.u32 %v709, 7
    %v711 = vsub.s32 2, %v710
    %v712 = vrot.slane %v682, %v711
    %v713 = vsub.f32 %v601, %v712
    %v714 = vsub.f32 %v606, %v712
    %v715 = vsub.f32 %v611, %v712
    %v716 = vlaneseq
    %v717 = vshrl.u32 %v716, 7
    %v718 = vsub.s32 3, %v717
    %v719 = vrot.slane %v696, %v718
    %v720 = vmul.f32 %v713, %v719
    %v721 = vmul.f32 %v714, %v719
    %v722 = vmul.f32 %v715, %v719
    %vm723 = vcmp.ge.f32.partialorder %v720, 0.0
    %vm724 = vcmp.ge.f32.partialorder %v721, 0.0
    %vm725 = vcmp.ge.f32.partialorder %v722, 0.0
    %v726 = vmul.f32 %v720, 0.2
    %v727 = vmul.f32 %v721, 0.2
    %v728 = vmul.f32 %v722, 0.2
    %v729 = vsel %vm723, %v720, %v726
    %v730 = vsel %vm724, %v721, %v727
    %v731 = vsel %vm725, %v722, %v728
    %732 = vst [vmem:[#allocation10] sm:$0xff] %v707
    %733 = vst [vmem:[#allocation10 + $0x8] sm:$0xff] %v708
    %s734 = scalar_lea.vmem [#allocation10], 16
    %735 = vst [vmem:[%s734 - $0x2] sm:$0xfc] %v729
    %736 = vst [vmem:[%s734 + $0x6] sm:$0xff] %v730
    %737 = vst [vmem:[%s734 + $0xe] sm:$0x3] %v731
    // Predicated region
    $region26: #{tpu_custom_call.1} parent=1 // pred_check
      _
    $region27: #{tpu_custom_call.1} parent=1 // pred_check_branch
      %739 = sbr.rel (0) target = $region29
    $region28: #{tpu_custom_call.1} parent=1 // pred_region
      %s741 = ssub.s32 512, 512
      %742 = vsyncadd [#allocation6], %s741
      %s743 = sshll.u32 [#allocation10], 4
      %s744 = int_to_ptr.vmem [resolvable:$true] %s743
      %749 = dma.vmem_to_hbm [thread:$0]  %s744, 512, %s3, [#allocation6], 128, 128, 8
    $region29: #{tpu_custom_call.1} parent=1 // pred_fallthru
      _
    // Predicated region
    $region30: #{tpu_custom_call.1} parent=1 // pred_check
      _
    $region31: #{tpu_custom_call.1} parent=1 // pred_check_branch
      %751 = sbr.rel (0) target = $region33
    $region32: #{tpu_custom_call.1} parent=1 // pred_region
      %752 = dma.done [#allocation6], 512
    $region33: #{tpu_custom_call.1} parent=1 // pred_fallthru
      _
    %753 = vsyncpa [#allocation5], 1
    %754 = vsyncpa [#allocation8], 1
    %755 = vsyncpa [#allocation6], 1

</llo_original>
